<compile_context>
chip_gen: v6e
topology: v6e:2x2x1
jax: 0.10.0
libtpu: 0.0.40
codegen_flags: <defaults>
</compile_context>

<pallas_src>
import functools

import jax
import jax.numpy as jnp
from jax import lax
from jax.experimental import pallas as pl
from jax.experimental.pallas import tpu as pltpu


def _pick_block(n, cap):
    """Largest multiple of 128 that divides `n` and is <= cap."""
    best = None
    t = 128
    limit = min(n, cap)
    while t <= limit:
        if n % t == 0:
            best = t
        t += 128
    return best


def _seg_loss_kernel(w_ref, x_ref, t_ref, out_ref, *, chunk):
    # w_ref  : (C,)  f32 in SMEM (scalar-prefetched class weights)
    # x_ref  : (C, T) logits tile, native dtype (cast to f32 in-kernel)
    # t_ref  : (1, T) int32 target tile
    # out_ref: (8, T) f32 per-batch resident accumulator
    #          rows: 0 inter, 1 probs_fg, 2 tgt_fg, 3 weighted_nll, 4 weight_sum
    C, T = x_ref.shape
    n_chunks = T // chunk

    @pl.when(pl.program_id(1) == 0)
    def _():
        out_ref[...] = jnp.zeros_like(out_ref)

    def body(ci, carry):
        off = pl.multiple_of(ci * chunk, chunk)
        sl = pl.ds(off, chunk)

        x = x_ref[:, sl].astype(jnp.float32)          # (C, chunk)
        tgt = t_ref[:, sl]                            # (1, chunk) int32

        # softmax / log-softmax statistics over the class (sublane) axis
        m = jnp.max(x, axis=0, keepdims=True)         # (1, chunk)
        e = jnp.exp(x - m)                            # (C, chunk)
        s = jnp.sum(e, axis=0, keepdims=True)         # (1, chunk)
        # EUP divide; approx=True would drift beyond the 1e-5 check, keep exact.
        inv_s = pl.reciprocal(s, approx=False)
        lse = m + jnp.log(s)                          # (1, chunk)

        # gather-by-compare over the small, static class axis
        x_t = jnp.zeros_like(m)   # logit at the target class
        w_t = jnp.zeros_like(m)   # class weight at the target class
        e_t = jnp.zeros_like(m)   # exp(logit - m) at the target class
        for c in range(C):
            mask = (tgt == c).astype(jnp.float32)
            x_t = x_t + x[c:c + 1, :] * mask
            w_t = w_t + w_ref[c] * mask
            e_t = e_t + e[c:c + 1, :] * mask

        tgt_fg = (tgt != 0).astype(jnp.float32)       # sum_{c>=1} onehot[c]
        probs_fg = 1.0 - e[0:1, :] * inv_s            # sum_{c>=1} probs[c]
        inter = e_t * inv_s * tgt_fg                  # probs[tgt] on foreground
        nll = lse - x_t                               # -log softmax[tgt]

        # direct row-slice accumulation (no concatenate, no zero rows)
        out_ref[0:1, sl] += inter
        out_ref[1:2, sl] += probs_fg
        out_ref[2:3, sl] += tgt_fg
        out_ref[3:4, sl] += nll * w_t
        out_ref[4:5, sl] += w_t
        return carry

    lax.fori_loop(0, n_chunks, body, 0, unroll=True)


def seg_loss(logits, target, weight, alpha=0.5, max_tile=2048, max_chunk=512):
    """logits: (B, C, H, W); target: (B, H, W) int; weight: (C,) float."""
    B, C, H, W = logits.shape
    HW = H * W
    # TODO(synk): support H*W not divisible by 128 via a masked tail tile.
    assert HW % 128 == 0, "H*W must be a multiple of 128"

    tile = _pick_block(HW, max_tile)      # large DMA block
    chunk = _pick_block(tile, max_chunk)  # in-kernel lane chunk (vreg pressure)
    n_tiles = HW // tile

    x = logits.reshape(B, C, HW)                      # keep native dtype (bf16 ok)
    t = target.reshape(B, 1, HW).astype(jnp.int32)
    w = weight.astype(jnp.float32)

    kernel = functools.partial(_seg_loss_kernel, chunk=chunk)

    partials = pl.pallas_call(
        kernel,
        out_shape=jax.ShapeDtypeStruct((B, 8, tile), jnp.float32),
        grid_spec=pltpu.PrefetchScalarGridSpec(
            num_scalar_prefetch=1,
            grid=(B, n_tiles),
            in_specs=[
                pl.BlockSpec((None, C, tile), lambda b, j, w: (b, 0, j)),
                pl.BlockSpec((None, 1, tile), lambda b, j, w: (b, 0, j)),
            ],
            out_specs=pl.BlockSpec((None, 8, tile), lambda b, j, w: (b, 0, 0)),
        ),
        compiler_params=pltpu.CompilerParams(
            # per-batch output blocks -> batch axis is safely parallel (v7x
            # megacore); j is the accumulation axis.
            dimension_semantics=("parallel", "arbitrary")
        ),
    )(w, x, t)

    sums = jnp.sum(partials, axis=(0, 2))             # (8,)
    inter, p_fg, t_fg, wnll, wsum = sums[0], sums[1], sums[2], sums[3], sums[4]

    smooth = 0.01
    dice = 2.0 * inter / (p_fg + t_fg + smooth)
    ce = wnll / wsum                                  # weighted-mean cross entropy
    return (1.0 - alpha) * ce + alpha * (1.0 - dice)


def _seg_loss_ref(logits, target, weight, alpha=0.5):
    """Pure-JAX reference mirroring the PyTorch forward."""
    smooth = 0.01
    B, C, H, W = logits.shape
    logits = logits.astype(jnp.float32)
    probs = jax.nn.softmax(logits, axis=1)                       # (B,C,H,W)
    onehot = jax.nn.one_hot(target, C, axis=-1)                  # (B,H,W,C)
    p = probs.reshape(B, C, H * W)[:, 1:, :]
    tt = jnp.moveaxis(onehot, -1, 1).reshape(B, C, H * W)[:, 1:, :]
    inter = jnp.sum(p * tt)
    union = jnp.sum(p) + jnp.sum(tt) + smooth
    dice = 2.0 * inter / union
    logp = jax.nn.log_softmax(logits, axis=1)                    # (B,C,H,W)
    tgt_oh = jnp.moveaxis(jax.nn.one_hot(target, C, axis=-1), -1, 1)
    nll = -jnp.sum(logp * tgt_oh, axis=1)                        # (B,H,W)
    w_t = weight[target]
    ce = jnp.sum(nll * w_t) / jnp.sum(w_t)
    return (1.0 - alpha) * ce + alpha * (1.0 - dice)


if __name__ == "__main__":
    key = jax.random.PRNGKey(0)
    k1, k2 = jax.random.split(key)

    B, C, H, W = 2, 4, 16, 16
    logits = jax.random.normal(k1, (B, C, H, W), dtype=jnp.float32)
    target = jax.random.randint(k2, (B, H, W), 0, C, dtype=jnp.int32)
    # deterministic class weights (analogue of `self.weight`)
    weight = jnp.array([0.2, 1.0, 1.5, 2.0], dtype=jnp.float32)
    alpha = 0.5

    loss = seg_loss(logits, target, weight, alpha=alpha)
    loss = jax.block_until_ready(loss)

    ref = _seg_loss_ref(logits, target, weight, alpha=alpha)
    assert jnp.allclose(loss, ref, rtol=1e-5, atol=1e-5), (loss, ref)

    print("KERNEL_OK")
</pallas_src>

<mosaic_0001>
module attributes {stable_mosaic.version = 11 : i64} {
  func.func @_seg_loss_kernel(%arg0: i32, %arg1: i32, %arg2: memref<4xf32, #tpu.memory_space<smem>>, %arg3: memref<1x4x256xf32, #tpu.memory_space<vmem>>, %arg4: memref<1x1x256xi32, #tpu.memory_space<vmem>>, %arg5: memref<1x8x256xf32, #tpu.memory_space<vmem>>) attributes {dimension_semantics = [#tpu.dimension_semantics<parallel>, #tpu.dimension_semantics<arbitrary>], iteration_bounds = array<i64: 2, 1>, scalar_prefetch = 1 : i64, scratch_operands = 0 : i64, tpu.core_type = #tpu.core_type<tc>, window_params = [{transform_indices = @transform_0, window_bounds = array<i64: 1, 4, 256>}, {transform_indices = @transform_1, window_bounds = array<i64: 1, 1, 256>}, {transform_indices = @transform_2, window_bounds = array<i64: 1, 8, 256>}]} {
    %c0_i32 = arith.constant 0 : i32
    %0 = arith.cmpi eq, %arg1, %c0_i32 : i32
    %1 = arith.extui %0 : i1 to i32
    %c0_i32_0 = arith.constant 0 : i32
    %2 = arith.cmpi ne, %1, %c0_i32_0 : i32
    scf.if %2 {
      %cst_33 = arith.constant 0.000000e+00 : f32
      %132 = vector.broadcast %cst_33 : f32 to vector<8x256xf32>
      %c0_34 = arith.constant 0 : index
      %c0_35 = arith.constant 0 : index
      %c0_36 = arith.constant 0 : index
      %133 = vector.load %arg5[%c0_34, %c0_35, %c0_36] : memref<1x8x256xf32, #tpu.memory_space<vmem>>, vector<1x8x256xf32>
      %134 = vector.shape_cast %133 : vector<1x8x256xf32> to vector<8x256xf32>
      %135 = vector.shape_cast %132 : vector<8x256xf32> to vector<1x8x256xf32>
      tpu.vector_store %arg5[%c0_34, %c0_35, %c0_36], %135 {strides = array<i32>} : memref<1x8x256xf32, #tpu.memory_space<vmem>>, vector<1x8x256xf32>,
    } else {
    }
    %c0_i32_1 = arith.constant 0 : i32
    %c256_i32 = arith.constant 256 : i32
    %3 = arith.muli %c0_i32_1, %c256_i32 : i32
    %4 = tpu.assume_multiple %3, 256 : i32
    %c0 = arith.constant 0 : index
    %c0_2 = arith.constant 0 : index
    %5 = arith.index_cast %4 : i32 to index
    %6 = vector.load %arg3[%c0, %c0_2, %5] : memref<1x4x256xf32, #tpu.memory_space<vmem>>, vector<1x4x256xf32>
    %7 = vector.shape_cast %6 : vector<1x4x256xf32> to vector<4x256xf32>
    %c0_3 = arith.constant 0 : index
    %c0_4 = arith.constant 0 : index
    %8 = arith.index_cast %4 : i32 to index
    %9 = vector.load %arg4[%c0_3, %c0_4, %8] : memref<1x1x256xi32, #tpu.memory_space<vmem>>, vector<1x1x256xi32>
    %10 = vector.shape_cast %9 : vector<1x1x256xi32> to vector<1x256xi32>
    %cst = arith.constant dense<0xFF800000> : vector<256xf32>
    %11 = vector.multi_reduction <maximumf>, %7, %cst [0] : vector<4x256xf32> to vector<256xf32>
    %12 = vector.shape_cast %11 : vector<256xf32> to vector<1x256xf32>
    %13 = vector.broadcast %12 : vector<1x256xf32> to vector<4x256xf32>
    %14 = arith.subf %7, %13 : vector<4x256xf32>
    %15 = math.exp %14 : vector<4x256xf32>
    %cst_5 = arith.constant dense<0.000000e+00> : vector<256xf32>
    %16 = vector.multi_reduction <add>, %15, %cst_5 [0] : vector<4x256xf32> to vector<256xf32>
    %17 = vector.shape_cast %16 : vector<256xf32> to vector<1x256xf32>
    %18 = tpu.reciprocal %17 : vector<1x256xf32> -> vector<1x256xf32>
    %19 = math.log %17 : vector<1x256xf32>
    %20 = arith.addf %12, %19 : vector<1x256xf32>
    %cst_6 = arith.constant 0.000000e+00 : f32
    %21 = vector.broadcast %cst_6 : f32 to vector<1x256xf32>
    %cst_7 = arith.constant 0.000000e+00 : f32
    %22 = vector.broadcast %cst_7 : f32 to vector<1x256xf32>
    %cst_8 = arith.constant 0.000000e+00 : f32
    %23 = vector.broadcast %cst_8 : f32 to vector<1x256xf32>
    %c0_i32_9 = arith.constant 0 : i32
    %24 = vector.broadcast %c0_i32_9 : i32 to vector<1x256xi32>
    %25 = arith.cmpi eq, %10, %24 : vector<1x256xi32>
    %26 = arith.extui %25 : vector<1x256xi1> to vector<1x256xi32>
    %27 = arith.sitofp %26 : vector<1x256xi32> to vector<1x256xf32>
    %28 = vector.extract_strided_slice %7 {offsets = [0, 0], sizes = [1, 256], strides = [1, 1]} : vector<4x256xf32> to vector<1x256xf32>
    %29 = arith.mulf %28, %27 : vector<1x256xf32>
    %30 = arith.addf %21, %29 : vector<1x256xf32>
    %c0_10 = arith.constant 0 : index
    %31 = memref.load %arg2[%c0_10] : memref<4xf32, #tpu.memory_space<smem>>
    %32 = vector.broadcast %31 : f32 to vector<1x256xf32>
    %33 = arith.mulf %32, %27 : vector<1x256xf32>
    %34 = arith.addf %22, %33 : vector<1x256xf32>
    %35 = vector.extract_strided_slice %15 {offsets = [0, 0], sizes = [1, 256], strides = [1, 1]} : vector<4x256xf32> to vector<1x256xf32>
    %36 = arith.mulf %35, %27 : vector<1x256xf32>
    %37 = arith.addf %23, %36 : vector<1x256xf32>
    %c1_i32 = arith.constant 1 : i32
    %38 = vector.broadcast %c1_i32 : i32 to vector<1x256xi32>
    %39 = arith.cmpi eq, %10, %38 : vector<1x256xi32>
    %40 = arith.extui %39 : vector<1x256xi1> to vector<1x256xi32>
    %41 = arith.sitofp %40 : vector<1x256xi32> to vector<1x256xf32>
    %42 = vector.extract_strided_slice %7 {offsets = [1, 0], sizes = [1, 256], strides = [1, 1]} : vector<4x256xf32> to vector<1x256xf32>
    %43 = arith.mulf %42, %41 : vector<1x256xf32>
    %44 = arith.addf %30, %43 : vector<1x256xf32>
    %c1 = arith.constant 1 : index
    %45 = memref.load %arg2[%c1] : memref<4xf32, #tpu.memory_space<smem>>
    %46 = vector.broadcast %45 : f32 to vector<1x256xf32>
    %47 = arith.mulf %46, %41 : vector<1x256xf32>
    %48 = arith.addf %34, %47 : vector<1x256xf32>
    %49 = vector.extract_strided_slice %15 {offsets = [1, 0], sizes = [1, 256], strides = [1, 1]} : vector<4x256xf32> to vector<1x256xf32>
    %50 = arith.mulf %49, %41 : vector<1x256xf32>
    %51 = arith.addf %37, %50 : vector<1x256xf32>
    %c2_i32 = arith.constant 2 : i32
    %52 = vector.broadcast %c2_i32 : i32 to vector<1x256xi32>
    %53 = arith.cmpi eq, %10, %52 : vector<1x256xi32>
    %54 = arith.extui %53 : vector<1x256xi1> to vector<1x256xi32>
    %55 = arith.sitofp %54 : vector<1x256xi32> to vector<1x256xf32>
    %56 = vector.extract_strided_slice %7 {offsets = [2, 0], sizes = [1, 256], strides = [1, 1]} : vector<4x256xf32> to vector<1x256xf32>
    %57 = arith.mulf %56, %55 : vector<1x256xf32>
    %58 = arith.addf %44, %57 : vector<1x256xf32>
    %c2 = arith.constant 2 : index
    %59 = memref.load %arg2[%c2] : memref<4xf32, #tpu.memory_space<smem>>
    %60 = vector.broadcast %59 : f32 to vector<1x256xf32>
    %61 = arith.mulf %60, %55 : vector<1x256xf32>
    %62 = arith.addf %48, %61 : vector<1x256xf32>
    %63 = vector.extract_strided_slice %15 {offsets = [2, 0], sizes = [1, 256], strides = [1, 1]} : vector<4x256xf32> to vector<1x256xf32>
    %64 = arith.mulf %63, %55 : vector<1x256xf32>
    %65 = arith.addf %51, %64 : vector<1x256xf32>
    %c3_i32 = arith.constant 3 : i32
    %66 = vector.broadcast %c3_i32 : i32 to vector<1x256xi32>
    %67 = arith.cmpi eq, %10, %66 : vector<1x256xi32>
    %68 = arith.extui %67 : vector<1x256xi1> to vector<1x256xi32>
    %69 = arith.sitofp %68 : vector<1x256xi32> to vector<1x256xf32>
    %70 = vector.extract_strided_slice %7 {offsets = [3, 0], sizes = [1, 256], strides = [1, 1]} : vector<4x256xf32> to vector<1x256xf32>
    %71 = arith.mulf %70, %69 : vector<1x256xf32>
    %72 = arith.addf %58, %71 : vector<1x256xf32>
    %c3 = arith.constant 3 : index
    %73 = memref.load %arg2[%c3] : memref<4xf32, #tpu.memory_space<smem>>
    %74 = vector.broadcast %73 : f32 to vector<1x256xf32>
    %75 = arith.mulf %74, %69 : vector<1x256xf32>
    %76 = arith.addf %62, %75 : vector<1x256xf32>
    %77 = vector.extract_strided_slice %15 {offsets = [3, 0], sizes = [1, 256], strides = [1, 1]} : vector<4x256xf32> to vector<1x256xf32>
    %78 = arith.mulf %77, %69 : vector<1x256xf32>
    %79 = arith.addf %65, %78 : vector<1x256xf32>
    %c0_i32_11 = arith.constant 0 : i32
    %80 = vector.broadcast %c0_i32_11 : i32 to vector<1x256xi32>
    %81 = arith.cmpi ne, %10, %80 : vector<1x256xi32>
    %82 = arith.extui %81 : vector<1x256xi1> to vector<1x256xi32>
    %83 = arith.sitofp %82 : vector<1x256xi32> to vector<1x256xf32>
    %84 = vector.extract_strided_slice %15 {offsets = [0, 0], sizes = [1, 256], strides = [1, 1]} : vector<4x256xf32> to vector<1x256xf32>
    %85 = arith.mulf %84, %18 : vector<1x256xf32>
    %cst_12 = arith.constant 1.000000e+00 : f32
    %86 = vector.broadcast %cst_12 : f32 to vector<1x256xf32>
    %87 = arith.subf %86, %85 : vector<1x256xf32>
    %88 = arith.mulf %79, %18 : vector<1x256xf32>
    %89 = arith.mulf %88, %83 : vector<1x256xf32>
    %90 = arith.subf %20, %72 : vector<1x256xf32>
    %c0_13 = arith.constant 0 : index
    %c0_14 = arith.constant 0 : index
    %91 = arith.index_cast %4 : i32 to index
    %92 = vector.load %arg5[%c0_13, %c0_14, %91] : memref<1x8x256xf32, #tpu.memory_space<vmem>>, vector<1x1x256xf32>
    %93 = vector.shape_cast %92 : vector<1x1x256xf32> to vector<1x256xf32>
    %94 = arith.addf %93, %89 : vector<1x256xf32>
    %c0_15 = arith.constant 0 : index
    %c0_16 = arith.constant 0 : index
    %95 = arith.index_cast %4 : i32 to index
    %96 = vector.load %arg5[%c0_15, %c0_16, %95] : memref<1x8x256xf32, #tpu.memory_space<vmem>>, vector<1x1x256xf32>
    %97 = vector.shape_cast %96 : vector<1x1x256xf32> to vector<1x256xf32>
    %98 = vector.shape_cast %94 : vector<1x256xf32> to vector<1x1x256xf32>
    tpu.vector_store %arg5[%c0_15, %c0_16, %95], %98 {strides = array<i32>} : memref<1x8x256xf32, #tpu.memory_space<vmem>>, vector<1x1x256xf32>,
    %c0_17 = arith.constant 0 : index
    %c1_18 = arith.constant 1 : index
    %99 = arith.index_cast %4 : i32 to index
    %100 = vector.load %arg5[%c0_17, %c1_18, %99] : memref<1x8x256xf32, #tpu.memory_space<vmem>>, vector<1x1x256xf32>
    %101 = vector.shape_cast %100 : vector<1x1x256xf32> to vector<1x256xf32>
    %102 = arith.addf %101, %87 : vector<1x256xf32>
    %c0_19 = arith.constant 0 : index
    %c1_20 = arith.constant 1 : index
    %103 = arith.index_cast %4 : i32 to index
    %104 = vector.load %arg5[%c0_19, %c1_20, %103] : memref<1x8x256xf32, #tpu.memory_space<vmem>>, vector<1x1x256xf32>
    %105 = vector.shape_cast %104 : vector<1x1x256xf32> to vector<1x256xf32>
    %106 = vector.shape_cast %102 : vector<1x256xf32> to vector<1x1x256xf32>
    tpu.vector_store %arg5[%c0_19, %c1_20, %103], %106 {strides = array<i32>} : memref<1x8x256xf32, #tpu.memory_space<vmem>>, vector<1x1x256xf32>,
    %c0_21 = arith.constant 0 : index
    %c2_22 = arith.constant 2 : index
    %107 = arith.index_cast %4 : i32 to index
    %108 = vector.load %arg5[%c0_21, %c2_22, %107] : memref<1x8x256xf32, #tpu.memory_space<vmem>>, vector<1x1x256xf32>
    %109 = vector.shape_cast %108 : vector<1x1x256xf32> to vector<1x256xf32>
    %110 = arith.addf %109, %83 : vector<1x256xf32>
    %c0_23 = arith.constant 0 : index
    %c2_24 = arith.constant 2 : index
    %111 = arith.index_cast %4 : i32 to index
    %112 = vector.load %arg5[%c0_23, %c2_24, %111] : memref<1x8x256xf32, #tpu.memory_space<vmem>>, vector<1x1x256xf32>
    %113 = vector.shape_cast %112 : vector<1x1x256xf32> to vector<1x256xf32>
    %114 = vector.shape_cast %110 : vector<1x256xf32> to vector<1x1x256xf32>
    tpu.vector_store %arg5[%c0_23, %c2_24, %111], %114 {strides = array<i32>} : memref<1x8x256xf32, #tpu.memory_space<vmem>>, vector<1x1x256xf32>,
    %c0_25 = arith.constant 0 : index
    %c3_26 = arith.constant 3 : index
    %115 = arith.index_cast %4 : i32 to index
    %116 = vector.load %arg5[%c0_25, %c3_26, %115] : memref<1x8x256xf32, #tpu.memory_space<vmem>>, vector<1x1x256xf32>
    %117 = vector.shape_cast %116 : vector<1x1x256xf32> to vector<1x256xf32>
    %118 = arith.mulf %90, %76 : vector<1x256xf32>
    %119 = arith.addf %117, %118 : vector<1x256xf32>
    %c0_27 = arith.constant 0 : index
    %c3_28 = arith.constant 3 : index
    %120 = arith.index_cast %4 : i32 to index
    %121 = vector.load %arg5[%c0_27, %c3_28, %120] : memref<1x8x256xf32, #tpu.memory_space<vmem>>, vector<1x1x256xf32>
    %122 = vector.shape_cast %121 : vector<1x1x256xf32> to vector<1x256xf32>
    %123 = vector.shape_cast %119 : vector<1x256xf32> to vector<1x1x256xf32>
    tpu.vector_store %arg5[%c0_27, %c3_28, %120], %123 {strides = array<i32>} : memref<1x8x256xf32, #tpu.memory_space<vmem>>, vector<1x1x256xf32>,
    %c0_29 = arith.constant 0 : index
    %c4 = arith.constant 4 : index
    %124 = arith.index_cast %4 : i32 to index
    %125 = vector.load %arg5[%c0_29, %c4, %124] : memref<1x8x256xf32, #tpu.memory_space<vmem>>, vector<1x1x256xf32>
    %126 = vector.shape_cast %125 : vector<1x1x256xf32> to vector<1x256xf32>
    %127 = arith.addf %126, %76 : vector<1x256xf32>
    %c0_30 = arith.constant 0 : index
    %c4_31 = arith.constant 4 : index
    %128 = arith.index_cast %4 : i32 to index
    %129 = vector.load %arg5[%c0_30, %c4_31, %128] : memref<1x8x256xf32, #tpu.memory_space<vmem>>, vector<1x1x256xf32>
    %130 = vector.shape_cast %129 : vector<1x1x256xf32> to vector<1x256xf32>
    %131 = vector.shape_cast %127 : vector<1x256xf32> to vector<1x1x256xf32>
    tpu.vector_store %arg5[%c0_30, %c4_31, %128], %131 {strides = array<i32>} : memref<1x8x256xf32, #tpu.memory_space<vmem>>, vector<1x1x256xf32>,
    %c1_i32_32 = arith.constant 1 : i32
    return
  }
  func.func @transform_0(%arg0: i32, %arg1: i32, %arg2: memref<4xf32, #tpu.memory_space<smem>>) -> (i32, i32, i32) {
    %c0_i32 = arith.constant 0 : i32
    %c0_i32_0 = arith.constant 0 : i32
    return %arg0, %c0_i32, %arg1 : i32, i32, i32
  }
  func.func @transform_1(%arg0: i32, %arg1: i32, %arg2: memref<4xf32, #tpu.memory_space<smem>>) -> (i32, i32, i32) {
    %c0_i32 = arith.constant 0 : i32
    %c0_i32_0 = arith.constant 0 : i32
    return %arg0, %c0_i32, %arg1 : i32, i32, i32
  }
  func.func @transform_2(%arg0: i32, %arg1: i32, %arg2: memref<4xf32, #tpu.memory_space<smem>>) -> (i32, i32, i32) {
    %c0_i32 = arith.constant 0 : i32
    %c0_i32_0 = arith.constant 0 : i32
    %c0_i32_1 = arith.constant 0 : i32
    return %arg0, %c0_i32, %c0_i32_0 : i32, i32, i32
  }
}

</mosaic_0001>

<llo_original>
// kernel: tpu_custom_call.1
$region0: #{tpu_custom_call.1}
  #allocation0 [shape = 'u32[]', space=smem, size = 0x4, offset = 0x4, fixed_abs, tag = 'smem constant byte address 0x4 - core index']
  #allocation1 [shape = 'u32[144,128]{1,0:T(1,128)}', space=vmem, size = 0x12000, scoped, tag = 'internal scratch']
  #allocation2 [shape = 's32[1]{0}', space=sflag, size = 0x4, scoped, tag = 'scoped memory for tpu_custom_call.1']
  #allocation3 [shape = 'u8[512]{0}', space=smem, size = 0x200, scoped, tag = 'prefetched SMEM operand 0']
  %s0 = inlined_call_operand.hbm [shape: f32[4], index: 0, kind: input, shape index: {}]
  %s1 = inlined_call_operand.hbm [shape: f32[2,4,256], index: 1, kind: input, shape index: {}]
  %s2 = inlined_call_operand.hbm [shape: s32[2,1,256], index: 2, kind: input, shape index: {}]
  %s3 = inlined_call_operand.hbm [shape: f32[2,8,256], index: 3, kind: output, shape index: {}]
  %s4 = sld [smem:[#allocation0]]
  $region53: #{tpu_custom_call.1} parent=0
    _
  %s6 = ssub.s32 1, %s4
  %s7 = scalar_select 0, %s6, %s4
  %9 = dma.hbm_to_smem %s0, 16, [#allocation3], [#allocation2]
  %10 = dma.done [#allocation2], 16
  %11 = sfence
  $region1: #{tpu_custom_call.1} parent=0
    #allocation4 [shape = 'u8[8192]{0}', space=vmem, size = 0x2000, scoped, tag = 'input window, operand 1']
    #allocation5 [shape = 's32[2]{0}', space=sflag, size = 0x8, scoped, tag = 'scoped memory for tpu_custom_call.1']
    #allocation6 [shape = 's32[2]{0}', space=sflag, size = 0x8, scoped, tag = 'scoped memory for tpu_custom_call.1']
    #allocation7 [shape = 'u8[2048]{0}', space=vmem, size = 0x800, scoped, tag = 'input window, operand 2']
    #allocation8 [shape = 's32[2]{0}', space=sflag, size = 0x8, scoped, tag = 'scoped memory for tpu_custom_call.1']
    #allocation9 [shape = 'u8[16384]{0}', space=vmem, size = 0x4000, scoped, tag = 'output window, operand 0']
    %12 = vsyncpa [#allocation5], 0
    %s13 = scalar_lea.sflag [#allocation5], 1
    %14 = vsyncpa %s13, 0
    %15 = vsyncpa [#allocation8], 0
    %s16 = scalar_lea.sflag [#allocation8], 1
    %17 = vsyncpa %s16, 0
    %18 = vsyncpa [#allocation6], 0
    %s19 = scalar_lea.sflag [#allocation6], 1
    %20 = vsyncpa %s19, 0
    loop: start=0, step=1, limit=4
    $region2: #{tpu_custom_call.1} parent=1 // loop_pre_header
      _
    $region3: #{tpu_custom_call.1} parent=1 // loop_header
      %s22 = sphi 0, %s26
      %p23 = scmp.ge.s32.totalorder %s22, 4
      %s29 = sphi 0, %s41
      %s30 = sphi 0, %s37
      %s31 = sphi 0, %s29
      %s32 = sphi 0, %s30
      %s33 = sphi 0, %s31
      %s34 = sphi 0, %s32
      %s46 = sphi 0, %s48
      %s49 = sphi 0, %s46
      %s50 = sphi 0, %s49
      %s66 = sphi 0, %s50
      %s74 = sphi 0, %s76
      %s77 = sphi 0, %s74
      %s78 = sphi 0, %s77
      %s94 = sphi 0, %s78
      %s100 = sphi 0, %s102
      %s103 = sphi 0, %s100
      %s104 = sphi 0, %s103
      %s120 = sphi 0, %s104
    $region4: #{tpu_custom_call.1} parent=1 // loop_header_branch
      %25 = sbr.rel (%p23) target = $region8
    $region5: #{tpu_custom_call.1} parent=1 // loop_body
      %s27 = ssub.s32 %s22, 1
      %s28 = ssub.s32 %s22, 2
      %s35 = sadd.s32 1, %s30
      %p36 = scmp.ge.s32.totalorder %s35, 1
      %s37 = scalar_select %p36, 0, %s35
      %s38 = sadd.s32 1, %s29
      %s39 = scalar_select %p36, %s38, %s29
      %p40 = scmp.ge.s32.totalorder %s39, 2
      %s41 = scalar_select %p40, 0, %s39
      %s42 = ssub.s32 %s29, %s41
      %s43 = ssub.s32 %s30, %s37
      %s44 = sor.u32 %s42, %s43
      %p45 = scmp.eq.s32.totalorder %s44, 0
      %s47 = sadd.s32 %s46, 1
      %s48 = scalar_select %p45, %s46, %s47
      %p51 = pneg %p45
      %p52 = scmp.eq.s32.totalorder %s22, 1
      %p53 = por %p51, %p52
      %p54 = scmp.ne.s32.totalorder %s46, %s49
      %p55 = scmp.eq.s32.totalorder %s22, 0
      %p56 = por %p54, %p55
      %p57 = scmp.ne.s32.totalorder %s46, %s49
      %p58 = scmp.eq.s32.totalorder %s27, 1
      %p59 = por %p57, %p58
      %p60 = scmp.ne.s32.totalorder %s49, %s50
      %p61 = scmp.eq.s32.totalorder %s27, 0
      %p62 = por %p60, %p61
      %p63 = scmp.ne.s32.totalorder %s49, %s50
      %p64 = scmp.eq.s32.totalorder %s28, 1
      %p65 = por %p63, %p64
      %p67 = scmp.ne.s32.totalorder %s50, %s66
      %p68 = scmp.eq.s32.totalorder %s28, 0
      %p69 = por %p67, %p68
      %s70 = ssub.s32 %s29, %s41
      %s71 = ssub.s32 %s30, %s37
      %s72 = sor.u32 %s70, %s71
      %p73 = scmp.eq.s32.totalorder %s72, 0
      %s75 = sadd.s32 %s74, 1
      %s76 = scalar_select %p73, %s74, %s75
      %p79 = pneg %p73
      %p80 = scmp.eq.s32.totalorder %s22, 1
      %p81 = por %p79, %p80
      %p82 = scmp.ne.s32.totalorder %s74, %s77
      %p83 = scmp.eq.s32.totalorder %s22, 0
      %p84 = por %p82, %p83
      %p85 = scmp.ne.s32.totalorder %s74, %s77
      %p86 = scmp.eq.s32.totalorder %s27, 1
      %p87 = por %p85, %p86
      %p88 = scmp.ne.s32.totalorder %s77, %s78
      %p89 = scmp.eq.s32.totalorder %s27, 0
      %p90 = por %p88, %p89
      %p91 = scmp.ne.s32.totalorder %s77, %s78
      %p92 = scmp.eq.s32.totalorder %s28, 1
      %p93 = por %p91, %p92
      %p95 = scmp.ne.s32.totalorder %s78, %s94
      %p96 = scmp.eq.s32.totalorder %s28, 0
      %p97 = por %p95, %p96
      %s98 = ssub.s32 %s29, %s41
      %p99 = scmp.eq.s32.totalorder %s98, 0
      %s101 = sadd.s32 %s100, 1
      %s102 = scalar_select %p99, %s100, %s101
      %p105 = pneg %p99
      %p106 = scmp.eq.s32.totalorder %s22, 1
      %p107 = por %p105, %p106
      %p108 = scmp.ne.s32.totalorder %s100, %s103
      %p109 = scmp.eq.s32.totalorder %s22, 0
      %p110 = por %p108, %p109
      %p111 = scmp.ne.s32.totalorder %s100, %s103
      %p112 = scmp.eq.s32.totalorder %s27, 1
      %p113 = por %p111, %p112
      %p114 = scmp.ne.s32.totalorder %s103, %s104
      %p115 = scmp.eq.s32.totalorder %s27, 0
      %p116 = por %p114, %p115
      %p117 = scmp.ne.s32.totalorder %s103, %s104
      %p118 = scmp.eq.s32.totalorder %s28, 1
      %p119 = por %p117, %p118
      %p121 = scmp.ne.s32.totalorder %s104, %s120
      %p122 = scmp.eq.s32.totalorder %s28, 0
      %p123 = por %p121, %p122
      %p124 = scmp.le.s32.totalorder 1, %s22
      %p125 = scmp.lt.s32.totalorder %s22, 3
      %p126 = pnand %p124, %p125
      %p127 = pneg %p126
      // Predicated region
      $region9: #{tpu_custom_call.1} parent=5 // pred_check
        _
      $region10: #{tpu_custom_call.1} parent=5 // pred_check_branch
        %129 = sbr.rel (%p126) target = $region12
      $region11: #{tpu_custom_call.1} parent=5 // pred_region
        %s130 = ssub.s32 %s22, 1
      $region12: #{tpu_custom_call.1} parent=5 // pred_fallthru
        _
      %p131 = scmp.lt.s32.totalorder %s22, 2
      // Predicated region
      $region13: #{tpu_custom_call.1} parent=5 // pred_check
        %p132 = pneg %p131
      $region14: #{tpu_custom_call.1} parent=5 // pred_check_branch
        %134 = sbr.rel (%p132) target = $region16
      $region15: #{tpu_custom_call.1} parent=5 // pred_region
        // Predicated region
        $region17: #{tpu_custom_call.1} parent=15 // pred_check
          %p135 = pneg %p56
        $region18: #{tpu_custom_call.1} parent=15 // pred_check_branch
          %137 = sbr.rel (%p135) target = $region20
        $region19: #{tpu_custom_call.1} parent=15 // pred_region
          %s138 = sand.u32 %s46, 1
          %s139 = scalar_lea.sflag [#allocation5], %s138
          %s140 = sand.u32 %s46, 1
          %s141 = smul.addr %s140, 8
          %s142 = scalar_lea.vmem [#allocation4], %s141
          %s143 = smul.u32 2, %s30
          %s145 = ssub.s32 128, 128
          %146 = vsyncadd %s139, %s145
          %s147 = smul.addr %s29, 2
          %s148 = sadd.s32 %s143, %s147
          %s149 = smul.addr %s148, 64
          %s150 = scalar_lea.hbm %s1, %s149
          %s152 = sshll.u32 %s142, 4
          %s153 = int_to_ptr.vmem [resolvable:$true] %s152
          %155 = dma.hbm_to_vmem [thread:$0]  %s150, 128, %s153, %s139
        $region20: #{tpu_custom_call.1} parent=15 // pred_fallthru
          _
        // Predicated region
        $region21: #{tpu_custom_call.1} parent=15 // pred_check
          %p156 = pneg %p84
        $region22: #{tpu_custom_call.1} parent=15 // pred_check_branch
          %158 = sbr.rel (%p156) target = $region24
        $region23: #{tpu_custom_call.1} parent=15 // pred_region
          %s159 = sand.u32 %s74, 1
          %s160 = scalar_lea.sflag [#allocation8], %s159
          %s161 = sand.u32 %s74, 1
          %s162 = smul.addr %s161, 2
          %s163 = scalar_lea.vmem [#allocation7], %s162
          %s164 = smul.u32 2, %s30
          %s166 = ssub.s32 32, 32
          %167 = vsyncadd %s160, %s166
          %s168 = smul.addr %s29, 2
          %s169 = sadd.s32 %s164, %s168
          %s170 = smul.addr %s169, 16
          %s171 = scalar_lea.hbm %s2, %s170
          %s173 = sshll.u32 %s163, 4
          %s174 = int_to_ptr.vmem [resolvable:$true] %s173
          %176 = dma.hbm_to_vmem [thread:$0]  %s171, 32, %s174, %s160
        $region24: #{tpu_custom_call.1} parent=15 // pred_fallthru
          _
      $region16: #{tpu_custom_call.1} parent=5 // pred_fallthru
        _
      %p177 = scmp.le.s32.totalorder 1, %s22
      %p178 = scmp.lt.s32.totalorder %s22, 3
      %p179 = pnand %p177, %p178
      %p180 = pneg %p179
      // Predicated region
      $region25: #{tpu_custom_call.1} parent=5 // pred_check
        _
      $region26: #{tpu_custom_call.1} parent=5 // pred_check_branch
        %182 = sbr.rel (%p179) target = $region28
      $region27: #{tpu_custom_call.1} parent=5 // pred_region
        %s183 = ssub.s32 %s22, 1
        %s184 = sand.u32 %s49, 1
        %s185 = scalar_lea.sflag [#allocation5], %s184
        %s186 = sand.u32 %s49, 1
        %s187 = smul.addr %s186, 8
        %s188 = scalar_lea.vmem [#allocation4], %s187
        // Predicated region
        $region29: #{tpu_custom_call.1} parent=27 // pred_check
          %p189 = pneg %p62
        $region30: #{tpu_custom_call.1} parent=27 // pred_check_branch
          %191 = sbr.rel (%p189) target = $region32
        $region31: #{tpu_custom_call.1} parent=27 // pred_region
          %192 = dma.done %s185, 128
        $region32: #{tpu_custom_call.1} parent=27 // pred_fallthru
          _
        %s193 = sand.u32 %s77, 1
        %s194 = scalar_lea.sflag [#allocation8], %s193
        %s195 = sand.u32 %s77, 1
        %s196 = smul.addr %s195, 2
        %s197 = scalar_lea.vmem [#allocation7], %s196
        // Predicated region
        $region33: #{tpu_custom_call.1} parent=27 // pred_check
          %p198 = pneg %p90
        $region34: #{tpu_custom_call.1} parent=27 // pred_check_branch
          %200 = sbr.rel (%p198) target = $region36
        $region35: #{tpu_custom_call.1} parent=27 // pred_region
          %201 = dma.done %s194, 32
        $region36: #{tpu_custom_call.1} parent=27 // pred_fallthru
          _
        %s202 = sand.u32 %s49, 1
        %s203 = scalar_lea.sflag [#allocation5], %s202
        %s204 = sand.u32 %s49, 1
        %s205 = smul.addr %s204, 8
        %s206 = scalar_lea.vmem [#allocation4], %s205
        %p207 = pneg %p62
        %p208 = pneg %p59
        %s209 = sand.u32 %s77, 1
        %s210 = scalar_lea.sflag [#allocation8], %s209
        %s211 = sand.u32 %s77, 1
        %s212 = smul.addr %s211, 2
        %s213 = scalar_lea.vmem [#allocation7], %s212
        %p214 = pneg %p90
        %p215 = pneg %p87
        %p216 = pneg %p116
        %p217 = pneg %p113
        %s218 = sand.u32 %s103, 1
        %s219 = scalar_lea.sflag [#allocation6], %s218
        %s220 = sand.u32 %s103, 1
        %s221 = smul.addr %s220, 16
        %s222 = scalar_lea.vmem [#allocation9], %s221
        %s223 = smul.u32 2, %s32
        %s224 = smul.u32 2, %s32
        %p225 = scmp.eq.s32.totalorder %s32, 0
        // Predicated region
        $region37: #{tpu_custom_call.1} parent=27 // pred_check
          %p226 = pneg %p225
        $region38: #{tpu_custom_call.1} parent=27 // pred_check_branch
          %228 = sbr.rel (%p226) target = $region40
        $region39: #{tpu_custom_call.1} parent=27 // pred_region
          %229 = vst [vmem:[%s222] sm:$0xff] 0.0
          %230 = vst [vmem:[%s222 + $0x8] sm:$0xff] 0.0
        $region40: #{tpu_custom_call.1} parent=27 // pred_fallthru
          _
        %v231 = vld [vmem:[%s188] sm:$0xff]
        %v232 = vld [vmem:[%s197] sm:$0x3]
        %v234 = vcombine.high %v231, %v231
        %vm236 = vcmask 1043456
        %v237 = vsel %vm236, %v231, -inf
        %v238 = vrot.slane %v237, 4
        %v239 = vmax.f32 %v237, %v238
        %v240 = vrot.slane %v239, 2
        %v241 = vmax.f32 %v239, %v240
        %v242 = vrot.slane %v241, 1
        %v243 = vmax.f32 %v241, %v242
        %v244 = vsel %vm236, %v234, -inf
        %v245 = vrot.slane %v244, 4
        %v246 = vmax.f32 %v244, %v245
        %v247 = vrot.slane %v246, 2
        %v248 = vmax.f32 %v246, %v247
        %v249 = vrot.slane %v248, 1
        %v250 = vmax.f32 %v248, %v249
        %v253 = vcombine.low %v243, %v250
        %v255 = vsub.f32 %v231, %v253
        %v256 = vmul.f32 %v255, 1.442695
        %v257 = vpow.pop %v256
        %v259 = vcombine.high %v257, %v257
        %v261 = vsel %vm236, %v257, 0.0
        %v262 = vrot.slane %v261, 4
        %v263 = vadd.f32 %v261, %v262
        %v264 = vrot.slane %v263, 2
        %v265 = vadd.f32 %v263, %v264
        %v266 = vrot.slane %v265, 1
        %v267 = vadd.f32 %v265, %v266
        %v268 = vsel %vm236, %v259, 0.0
        %v269 = vrot.slane %v268, 4
        %v270 = vadd.f32 %v268, %v269
        %v271 = vrot.slane %v270, 2
        %v272 = vadd.f32 %v270, %v271
        %v273 = vrot.slane %v272, 1
        %v274 = vadd.f32 %v272, %v273
        %v275 = vrcp.pop %v267
        %v276 = vrcp.pop %v274
        %v277 = vlog2.pop %v267
        %v278 = vmul.f32 %v277, 0.6931472
        %v279 = vlog2.pop %v274
        %v280 = vmul.f32 %v279, 0.6931472
        %v281 = vadd.f32 %v243, %v278
        %v282 = vadd.f32 %v250, %v280
        %vm283 = vcmp.eq.s32.totalorder %v232, 0
        %v284 = vsel %vm283, 1, 0
        %v285 = vcvt.s32.f32 %v284
        %v288 = vunpack.c.l.s4 286326784
        %v289 = vunpack.c.0.s8 %v288
        %v290 = vlaneseq
        %v291 = vshrl.u32 %v290, 7
        %v292 = vsub.s32 %v289, %v291
        %v293 = vrot.slane %v285, %v292
        %v295 = vmul.f32 %v231, %v293
        %v296 = vadd.f32 %v295, 0.0
        %s297 = sld [smem:[#allocation3]]
        %v298 = vstv %s297
        %v299 = vmul.f32 %v298, %v285
        %v300 = vadd.f32 %v299, 0.0
        %v301 = vmul.f32 %v257, %v293
        %v302 = vadd.f32 %v301, 0.0
        %vm303 = vcmp.eq.s32.totalorder %v232, 1
        %v304 = vsel %vm303, 1, 0
        %v305 = vcvt.s32.f32 %v304
        %v308 = vunpack.c.l.s4 286326784
        %v309 = vunpack.c.0.s8 %v308
        %v310 = vlaneseq
        %v311 = vshrl.u32 %v310, 7
        %v312 = vsub.s32 %v309, %v311
        %v313 = vrot.slane %v305, %v312
        %v315 = vmul.f32 %v231, %v313
        %v317 = vrot.slane %v315, 5
        %v318 = vrot.slane %v317, 4
        %v320 = vadd.f32 %v296, %v318
        %s321 = sld [smem:[#allocation3 + $0x1]]
        %v322 = vstv %s321
        %v323 = vmul.f32 %v322, %v305
        %v324 = vadd.f32 %v300, %v323
        %v325 = vmul.f32 %v257, %v313
        %v327 = vrot.slane %v325, 5
        %v328 = vrot.slane %v327, 4
        %v330 = vadd.f32 %v302, %v328
        %vm331 = vcmp.eq.s32.totalorder %v232, 2
        %v332 = vsel %vm331, 1, 0
        %v333 = vcvt.s32.f32 %v332
        %v336 = vunpack.c.l.s4 286326784
        %v337 = vunpack.c.0.s8 %v336
        %v338 = vlaneseq
        %v339 = vshrl.u32 %v338, 7
        %v340 = vsub.s32 %v337, %v339
        %v341 = vrot.slane %v333, %v340
        %v343 = vmul.f32 %v231, %v341
        %v345 = vrot.slane %v343, 6
        %v346 = vrot.slane %v345, 4
        %v348 = vadd.f32 %v320, %v346
        %s349 = sld [smem:[#allocation3 + $0x2]]
        %v350 = vstv %s349
        %v351 = vmul.f32 %v350, %v333
        %v352 = vadd.f32 %v324, %v351
        %v353 = vmul.f32 %v257, %v341
        %v355 = vrot.slane %v353, 6
        %v356 = vrot.slane %v355, 4
        %v358 = vadd.f32 %v330, %v356
        %vm359 = vcmp.eq.s32.totalorder %v232, 3
        %v360 = vsel %vm359, 1, 0
        %v361 = vcvt.s32.f32 %v360
        %v364 = vunpack.c.l.s4 286326784
        %v365 = vunpack.c.0.s8 %v364
        %v366 = vlaneseq
        %v367 = vshrl.u32 %v366, 7
        %v368 = vsub.s32 %v365, %v367
        %v369 = vrot.slane %v361, %v368
        %v371 = vmul.f32 %v231, %v369
        %v373 = vrot.slane %v371, 7
        %v374 = vrot.slane %v373, 4
        %v376 = vadd.f32 %v348, %v374
        %s377 = sld [smem:[#allocation3 + $0x3]]
        %v378 = vstv %s377
        %v379 = vmul.f32 %v378, %v361
        %v380 = vadd.f32 %v352, %v379
        %v381 = vmul.f32 %v257, %v369
        %v383 = vrot.slane %v381, 7
        %v384 = vrot.slane %v383, 4
        %v386 = vadd.f32 %v358, %v384
        %vm387 = vcmp.ne.s32.totalorder %v232, 0
        %v388 = vsel %vm387, 1, 0
        %v389 = vcvt.s32.f32 %v388
        %v392 = vcombine.low %v275, %v276
        %v394 = vmul.f32 %v257, %v392
        %v395 = vsub.f32 1.0, %v394
        %v396 = vmul.f32 %v386, %v392
        %v399 = vunpack.c.l.s4 286326784
        %v400 = vunpack.c.0.s8 %v399
        %v401 = vlaneseq
        %v402 = vshrl.u32 %v401, 7
        %v403 = vsub.s32 %v400, %v402
        %v404 = vrot.slane %v389, %v403
        %v406 = vmul.f32 %v396, %v404
        %v408 = vlaneseq
        %v409 = vshrl.u32 %v408, 7
        %v410 = vsub.s32 0, %v409
        %v411 = vrot.slane %v376, %v410
        %v412 = vlaneseq
        %v413 = vshrl.u32 %v412, 7
        %v414 = vsub.s32 4, %v413
        %v415 = vrot.slane %v376, %v414
        %v418 = vsub.f32 %v281, %v411
        %v419 = vsub.f32 %v282, %v415
        %v420 = vld [vmem:[%s222] ss:$8 sm:$0x3]
        %v423 = vunpack.c.l.s4 1966171168
        %v424 = vunpack.c.0.s8 %v423
        %v425 = vlaneseq
        %v426 = vshrl.u32 %v425, 7
        %v427 = vsub.s32 %v424, %v426
        %v428 = vrot.slane %v406, %v427
        %v430 = vunpack.c.l.s4 1966171168
        %v431 = vunpack.c.0.s8 %v430
        %v432 = vlaneseq
        %v433 = vshrl.u32 %v432, 7
        %v434 = vsub.s32 %v431, %v433
        %v435 = vrot.slane %v428, %v434
        %v437 = vadd.f32 %v420, %v435
        %v438 = vlaneseq
        %vm439 = vcmp.ge.s32.totalorder %v438, 0
        %vm440 = vcmp.lt.s32.totalorder %v438, 256
        %vm441 = vmand %vm439, %vm440
        %442 = vst.msk [vmem:[%s222] ss:$8 sm:$0x3] %vm441, %v437
        %443 = vst.msk [vmem:[%s222] ss:$8 sm:$0x0] %vm441, %v437
        %s444 = scalar_lea.vmem %s222, 1 [#allocation9]
        %v445 = vld [vmem:[%s444] ss:$8 sm:$0x3]
        %v448 = vunpack.c.l.s4 1966171168
        %v449 = vunpack.c.0.s8 %v448
        %v450 = vlaneseq
        %v451 = vshrl.u32 %v450, 7
        %v452 = vsub.s32 %v449, %v451
        %v453 = vrot.slane %v395, %v452
        %v455 = vunpack.c.l.s4 1966171168
        %v456 = vunpack.c.0.s8 %v455
        %v457 = vlaneseq
        %v458 = vshrl.u32 %v457, 7
        %v459 = vsub.s32 %v456, %v458
        %v460 = vrot.slane %v453, %v459
        %v462 = vadd.f32 %v445, %v460
        %463 = vst.msk [vmem:[%s444] ss:$8 sm:$0x3] %vm441, %v462
        %464 = vst.msk [vmem:[%s444] ss:$8 sm:$0x0] %vm441, %v462
        %s465 = scalar_lea.vmem %s222, 2 [#allocation9]
        %v466 = vld [vmem:[%s465] ss:$8 sm:$0x3]
        %v467 = vadd.f32 %v466, %v389
        %468 = vst.msk [vmem:[%s465] ss:$8 sm:$0x3] %vm441, %v467
        %469 = vst.msk [vmem:[%s465] ss:$8 sm:$0x0] %vm441, %v467
        %s470 = scalar_lea.vmem %s222, 3 [#allocation9]
        %v471 = vld [vmem:[%s470] ss:$8 sm:$0x3]
        %v473 = vlaneseq
        %v474 = vshrl.u32 %v473, 7
        %v475 = vsub.s32 0, %v474
        %v476 = vrot.slane %v380, %v475
        %v477 = vlaneseq
        %v478 = vshrl.u32 %v477, 7
        %v479 = vsub.s32 1, %v478
        %v480 = vrot.slane %v380, %v479
        %v483 = vmul.f32 %v418, %v476
        %v484 = vmul.f32 %v419, %v480
        %v487 = vcombine.low %v483, %v484
        %v489 = vunpack.c.l.s4 1966171168
        %v490 = vunpack.c.0.s8 %v489
        %v491 = vlaneseq
        %v492 = vshrl.u32 %v491, 7
        %v493 = vsub.s32 %v490, %v492
        %v494 = vrot.slane %v487, %v493
        %v496 = vunpack.c.l.s4 1966171168
        %v497 = vunpack.c.0.s8 %v496
        %v498 = vlaneseq
        %v499 = vshrl.u32 %v498, 7
        %v500 = vsub.s32 %v497, %v499
        %v501 = vrot.slane %v494, %v500
        %v503 = vadd.f32 %v471, %v501
        %504 = vst.msk [vmem:[%s470] ss:$8 sm:$0x3] %vm441, %v503
        %505 = vst.msk [vmem:[%s470] ss:$8 sm:$0x0] %vm441, %v503
        %s506 = scalar_lea.vmem %s222, 4 [#allocation9]
        %v507 = vld [vmem:[%s506] ss:$8 sm:$0x3]
        %v508 = vadd.f32 %v507, %v380
        %509 = vst.msk [vmem:[%s506] ss:$8 sm:$0x3] %vm441, %v508
        %510 = vst.msk [vmem:[%s506] ss:$8 sm:$0x0] %vm441, %v508
        %s511 = sand.u32 %s103, 1
        %s512 = scalar_lea.sflag [#allocation6], %s511
        %s513 = sand.u32 %s103, 1
        %s514 = smul.addr %s513, 16
        %s515 = scalar_lea.vmem [#allocation9], %s514
        // Predicated region
        $region41: #{tpu_custom_call.1} parent=27 // pred_check
          %p516 = pneg %p113
        $region42: #{tpu_custom_call.1} parent=27 // pred_check_branch
          %518 = sbr.rel (%p516) target = $region44
        $region43: #{tpu_custom_call.1} parent=27 // pred_region
          %s520 = ssub.s32 256, 256
          %521 = vsyncadd %s512, %s520
          %s522 = smul.addr %s31, 2
          %s523 = smul.addr %s522, 128
          %s524 = scalar_lea.hbm %s3, %s523
          %s526 = sshll.u32 %s515, 4
          %s527 = int_to_ptr.vmem [resolvable:$true] %s526
          %529 = dma.vmem_to_hbm [thread:$0]  %s527, 256, %s524, %s512
        $region44: #{tpu_custom_call.1} parent=27 // pred_fallthru
          _
      $region28: #{tpu_custom_call.1} parent=5 // pred_fallthru
        _
      %p530 = scmp.le.s32.totalorder 2, %s22
      // Predicated region
      $region45: #{tpu_custom_call.1} parent=5 // pred_check
        %p531 = pneg %p530
      $region46: #{tpu_custom_call.1} parent=5 // pred_check_branch
        %533 = sbr.rel (%p531) target = $region48
      $region47: #{tpu_custom_call.1} parent=5 // pred_region
        %s534 = ssub.s32 %s22, 2
        // Predicated region
        $region49: #{tpu_custom_call.1} parent=47 // pred_check
          %p535 = pneg %p119
        $region50: #{tpu_custom_call.1} parent=47 // pred_check_branch
          %537 = sbr.rel (%p535) target = $region52
        $region51: #{tpu_custom_call.1} parent=47 // pred_region
          %s538 = sand.u32 %s104, 1
          %s539 = scalar_lea.sflag [#allocation6], %s538
          %s540 = sand.u32 %s104, 1
          %s541 = smul.addr %s540, 16
          %s542 = scalar_lea.vmem [#allocation9], %s541
          %543 = dma.done %s539, 256
        $region52: #{tpu_custom_call.1} parent=47 // pred_fallthru
          _
      $region48: #{tpu_custom_call.1} parent=5 // pred_fallthru
        _
    $region6: #{tpu_custom_call.1} parent=1 // loop_footer
      %s26 = sadd.s32 1, %s22
    $region7: #{tpu_custom_call.1} parent=1 // loop_footer_branch
      %21 = sbr.rel target = $region3
    $region8: #{tpu_custom_call.1} parent=1 // loop_exit
      _
    %544 = vsyncpa [#allocation5], 1
    %s545 = scalar_lea.sflag [#allocation5], 1
    %546 = vsyncpa %s545, 1
    %547 = vsyncpa [#allocation8], 1
    %s548 = scalar_lea.sflag [#allocation8], 1
    %549 = vsyncpa %s548, 1
    %550 = vsyncpa [#allocation6], 1
    %s551 = scalar_lea.sflag [#allocation6], 1
    %552 = vsyncpa %s551, 1

</llo_original>
